<compile_context>
chip_gen: v7x
topology: tpu7x:2x2x1
jax: 0.10.0
libtpu: 0.0.40
codegen_flags: <defaults>
</compile_context>

<pallas_src>
import jax
import jax.numpy as jnp
from jax.experimental import pallas as pl
from jax.experimental.pallas import tpu as pltpu


def residual_kernel(p_ref, w1_ref, b1_ref, w2_ref, b2_ref, o_ref):
    # p_ref : (9*Cin, B*H*W)  transposed im2col patches (rows = (tap, cin))
    # w1_ref: (Cout, 9*Cin)   3x3 conv weights, taps folded into K
    # b1_ref: (Cout, 1)
    # w2_ref: (Cout, Cout)    1x1 conv weights (O, I)
    # b2_ref: (Cout, 1)
    # o_ref : (B, Cout, H*W)  lane-dense flattened-NCHW output
    B, Cout, HW = o_ref.shape
    Cin = w1_ref.shape[1] // 9

    p = p_ref[...]                                                  # (9*Cin, B*H*W)

    # 3x3 conv as one K = 9*Cin matmul with spatial on the lane/N dim.
    h = jnp.dot(w1_ref[...], p, preferred_element_type=jnp.float32)
    h = jnp.maximum(h + b1_ref[...], 0.0)                           # bias + ReLU

    # 1x1 conv + bias.
    y = jnp.dot(w2_ref[...], h, preferred_element_type=jnp.float32) + b2_ref[...]

    # Residual add: the centre tap (ky = kx = 1 -> t = 4) rows of the patch
    # matrix ARE the unpadded input, already in (Cin, B*H*W) layout.
    out = p[4 * Cin:5 * Cin, :] + y                                 # (Cout, B*H*W)

    # Per-image stores: lane slices at multiples of 128, lanes fully dense.
    for b in range(B):                                              # B is small & static
        o_ref[b] = out[:, b * HW:(b + 1) * HW].astype(o_ref.dtype)


def residual_layer(x_nchw, w1_oihw, b1, w2_oihw, b2):
    """x_nchw: (B, Cin, H, W) float32. Returns (B, Cout, H, W)."""
    B, Cin, H, W = x_nchw.shape
    Cout = w1_oihw.shape[0]
    assert Cin == Cout, "residual add requires in_channels == out_channels"

    # --- wrapper-side layout plumbing (all static slices / reshapes, fused by XLA) ---
    xpad = jnp.pad(x_nchw, ((0, 0), (0, 0), (1, 1), (1, 1)))        # (B, Cin, H+2, W+2)
    # Transposed im2col: rows ordered (tap, cin), columns ordered (b, h, w).
    taps = [xpad[:, :, ky:ky + H, kx:kx + W]                        # each (B, Cin, H, W)
            for ky in range(3) for kx in range(3)]
    patches = jnp.stack(taps, axis=0)                               # (9, B, Cin, H, W)
    patches = patches.transpose(0, 2, 1, 3, 4).reshape(9 * Cin, B * H * W)

    # OIHW -> (Cout, ky, kx, Cin) -> (Cout, 9*Cin); column order matches patch rows.
    w1k = jnp.transpose(w1_oihw, (0, 2, 3, 1)).reshape(Cout, 9 * Cin)
    w2k = w2_oihw[:, :, 0, 0]                                       # (Cout, Cin), O-major
    b1k = b1.reshape(Cout, 1)
    b2k = b2.reshape(Cout, 1)

    flops = 2 * B * H * W * (9 * Cin * Cout + Cout * Cout)
    bytes_accessed = 4 * (patches.size + B * Cout * H * W
                          + w1k.size + w2k.size + b1k.size + b2k.size)

    out = pl.pallas_call(
        residual_kernel,
        out_shape=jax.ShapeDtypeStruct((B, Cout, H * W), x_nchw.dtype),
        in_specs=[pl.BlockSpec(memory_space=pltpu.MemorySpace.VMEM)] * 5,
        out_specs=pl.BlockSpec(memory_space=pltpu.MemorySpace.VMEM),
        cost_estimate=pl.CostEstimate(flops=flops, transcendentals=0,
                                      bytes_accessed=bytes_accessed),
    )(patches, w1k, b1k, w2k, b2k)

    # (B, Cout, H*W) is flattened NCHW: the un-flatten is a free contiguous reshape.
    return out.reshape(B, Cout, H, W)


def reference(x_nchw, w1_oihw, b1, w2_oihw, b2):
    """Pure-JAX reference matching torch semantics (NCHW)."""
    dn = jax.lax.conv_dimension_numbers(x_nchw.shape, w1_oihw.shape,
                                        ("NCHW", "OIHW", "NCHW"))
    h = jax.lax.conv_general_dilated(x_nchw, w1_oihw, (1, 1), "SAME",
                                     dimension_numbers=dn)
    h = h + b1[None, :, None, None]
    h = jnp.maximum(h, 0.0)
    y = jax.lax.conv_general_dilated(h, w2_oihw, (1, 1), "VALID",
                                     dimension_numbers=dn)
    y = y + b2[None, :, None, None]
    return x_nchw + y


if __name__ == "__main__":
    key = jax.random.PRNGKey(0)
    B, C, H, W = 2, 4, 16, 16  # in_channels == out_channels == 4

    k_x, k_w1, k_b1, k_w2, k_b2 = jax.random.split(key, 5)
    x = jax.random.normal(k_x, (B, C, H, W), jnp.float32)
    w1 = jax.random.normal(k_w1, (C, C, 3, 3), jnp.float32) * 0.1  # OIHW
    b1 = jax.random.normal(k_b1, (C,), jnp.float32) * 0.1
    w2 = jax.random.normal(k_w2, (C, C, 1, 1), jnp.float32) * 0.1  # OIHW
    b2 = jax.random.normal(k_b2, (C,), jnp.float32) * 0.1

    out = residual_layer(x, w1, b1, w2, b2)
    jax.block_until_ready(out)

    ref = reference(x, w1, b1, w2, b2)
    assert out.shape == (B, C, H, W)
    assert jnp.max(jnp.abs(out - ref)) < 1e-4

    print("KERNEL_OK")
</pallas_src>

<mosaic_0001>
module attributes {stable_mosaic.version = 11 : i64} {
  func.func @residual_kernel(%arg0: memref<36x512xf32, #tpu.memory_space<vmem>>, %arg1: memref<4x36xf32, #tpu.memory_space<vmem>>, %arg2: memref<4x1xf32, #tpu.memory_space<vmem>>, %arg3: memref<4x4xf32, #tpu.memory_space<vmem>>, %arg4: memref<4x1xf32, #tpu.memory_space<vmem>>, %arg5: memref<2x4x256xf32, #tpu.memory_space<vmem>>) attributes {dimension_semantics = [], scalar_prefetch = 0 : i64, scratch_operands = 0 : i64, tpu.core_type = #tpu.core_type<tc>} {
    %c0 = arith.constant 0 : index
    %c0_0 = arith.constant 0 : index
    %0 = vector.load %arg0[%c0, %c0_0] : memref<36x512xf32, #tpu.memory_space<vmem>>, vector<36x512xf32>
    %c0_1 = arith.constant 0 : index
    %c0_2 = arith.constant 0 : index
    %1 = vector.load %arg1[%c0_1, %c0_2] : memref<4x36xf32, #tpu.memory_space<vmem>>, vector<4x36xf32>
    %cst = arith.constant dense<0.000000e+00> : vector<4x512xf32>
    %2 = tpu.matmul %1, %0, %cst {dimension_numbers = #tpu.dot_dimension_numbers<[1], [0], [0], [1], [0, 0, 1, 1], [], []>} : vector<4x36xf32>, vector<36x512xf32>, vector<4x512xf32> -> vector<4x512xf32>
    %c0_3 = arith.constant 0 : index
    %c0_4 = arith.constant 0 : index
    %3 = vector.load %arg2[%c0_3, %c0_4] : memref<4x1xf32, #tpu.memory_space<vmem>>, vector<4x1xf32>
    %4 = vector.broadcast %3 : vector<4x1xf32> to vector<4x512xf32>
    %5 = arith.addf %2, %4 : vector<4x512xf32>
    %cst_5 = arith.constant 0.000000e+00 : f32
    %6 = vector.broadcast %cst_5 : f32 to vector<4x512xf32>
    %7 = arith.maximumf %5, %6 : vector<4x512xf32>
    %c0_6 = arith.constant 0 : index
    %c0_7 = arith.constant 0 : index
    %8 = vector.load %arg3[%c0_6, %c0_7] : memref<4x4xf32, #tpu.memory_space<vmem>>, vector<4x4xf32>
    %cst_8 = arith.constant dense<0.000000e+00> : vector<4x512xf32>
    %9 = tpu.matmul %8, %7, %cst_8 {dimension_numbers = #tpu.dot_dimension_numbers<[1], [0], [0], [1], [0, 0, 1, 1], [], []>} : vector<4x4xf32>, vector<4x512xf32>, vector<4x512xf32> -> vector<4x512xf32>
    %c0_9 = arith.constant 0 : index
    %c0_10 = arith.constant 0 : index
    %10 = vector.load %arg4[%c0_9, %c0_10] : memref<4x1xf32, #tpu.memory_space<vmem>>, vector<4x1xf32>
    %11 = vector.broadcast %10 : vector<4x1xf32> to vector<4x512xf32>
    %12 = arith.addf %9, %11 : vector<4x512xf32>
    %13 = vector.extract_strided_slice %0 {offsets = [16, 0], sizes = [4, 512], strides = [1, 1]} : vector<36x512xf32> to vector<4x512xf32>
    %14 = arith.addf %13, %12 : vector<4x512xf32>
    %15 = vector.extract_strided_slice %14 {offsets = [0, 0], sizes = [4, 256], strides = [1, 1]} : vector<4x512xf32> to vector<4x256xf32>
    %c0_11 = arith.constant 0 : index
    %c0_12 = arith.constant 0 : index
    %c0_13 = arith.constant 0 : index
    %16 = vector.load %arg5[%c0_11, %c0_12, %c0_13] : memref<2x4x256xf32, #tpu.memory_space<vmem>>, vector<1x4x256xf32>
    %17 = vector.shape_cast %16 : vector<1x4x256xf32> to vector<4x256xf32>
    %18 = vector.shape_cast %15 : vector<4x256xf32> to vector<1x4x256xf32>
    tpu.vector_store %arg5[%c0_11, %c0_12, %c0_13], %18 {strides = array<i32>} : memref<2x4x256xf32, #tpu.memory_space<vmem>>, vector<1x4x256xf32>,
    %19 = vector.extract_strided_slice %14 {offsets = [0, 256], sizes = [4, 256], strides = [1, 1]} : vector<4x512xf32> to vector<4x256xf32>
    %c1 = arith.constant 1 : index
    %c0_14 = arith.constant 0 : index
    %c0_15 = arith.constant 0 : index
    %20 = vector.load %arg5[%c1, %c0_14, %c0_15] : memref<2x4x256xf32, #tpu.memory_space<vmem>>, vector<1x4x256xf32>
    %21 = vector.shape_cast %20 : vector<1x4x256xf32> to vector<4x256xf32>
    %22 = vector.shape_cast %19 : vector<4x256xf32> to vector<1x4x256xf32>
    tpu.vector_store %arg5[%c1, %c0_14, %c0_15], %22 {strides = array<i32>} : memref<2x4x256xf32, #tpu.memory_space<vmem>>, vector<1x4x256xf32>,
    return
  }
}

</mosaic_0001>

<llo_original>
// kernel: tpu_custom_call.1
$region0: #{tpu_custom_call.1}
  #allocation0 [shape = 'u32[]', space=smem, size = 0x4, offset = 0x4, fixed_abs, tag = 'smem constant byte address 0x4 - core index']
  #allocation1 [shape = 'u32[144,128]{1,0:T(1,128)}', space=vmem, size = 0x12000, scoped, tag = 'internal scratch']
  %s0 = inlined_call_operand.hbm [shape: f32[36,512], index: 0, kind: input, shape index: {}]
  %s1 = inlined_call_operand.vmem [shape: f32[4,36], index: 1, kind: input, shape index: {}]
  %s2 = inlined_call_operand.vmem [shape: f32[4,1], index: 2, kind: input, shape index: {}]
  %s3 = inlined_call_operand.vmem [shape: f32[4,4], index: 3, kind: input, shape index: {}]
  %s4 = inlined_call_operand.vmem [shape: f32[4,1], index: 4, kind: input, shape index: {}]
  %s5 = inlined_call_operand.hbm [shape: f32[2,4,256], index: 5, kind: output, shape index: {}]
  %s6 = sld [smem:[#allocation0]]
  $region34: #{tpu_custom_call.1} parent=0
    _
  %s8 = ssub.s32 1, %s6
  %s9 = scalar_select 0, %s8, %s6
  $region1: #{tpu_custom_call.1} parent=0
    #allocation2 [shape = 'u8[81920]{0}', space=vmem, size = 0x14000, scoped, tag = 'input window, operand 0, single buffered']
    #allocation3 [shape = 's32[1]{0}', space=sflag, size = 0x4, scoped, tag = 'scoped memory for tpu_custom_call.1']
    #allocation4 [shape = 's32[1]{0}', space=sflag, size = 0x4, scoped, tag = 'scoped memory for tpu_custom_call.1']
    #allocation5 [shape = 'u8[8192]{0}', space=vmem, size = 0x2000, scoped, tag = 'output window, operand 0, single buffered']
    %10 = vsyncpa [#allocation3], 0
    %11 = vsyncpa [#allocation4], 0
    // Predicated region
    $region2: #{tpu_custom_call.1} parent=1 // pred_check
      _
    $region3: #{tpu_custom_call.1} parent=1 // pred_check_branch
      %13 = sbr.rel (0) target = $region5
    $region4: #{tpu_custom_call.1} parent=1 // pred_region
      %s15 = ssub.s32 2560, 2560
      %16 = vsyncadd [#allocation3], %s15
      %s17 = sshll.u32 [#allocation2], 4
      %s18 = int_to_ptr.vmem [resolvable:$true] %s17
      %23 = dma.hbm_to_vmem [thread:$0]  %s0, 2560, %s18, [#allocation3], 512, 512, 32
    $region5: #{tpu_custom_call.1} parent=1 // pred_fallthru
      _
    // Predicated region
    $region6: #{tpu_custom_call.1} parent=1 // pred_check
      _
    $region7: #{tpu_custom_call.1} parent=1 // pred_check_branch
      %25 = sbr.rel (0) target = $region9
    $region8: #{tpu_custom_call.1} parent=1 // pred_region
      _
    $region9: #{tpu_custom_call.1} parent=1 // pred_fallthru
      _
    // Predicated region
    $region10: #{tpu_custom_call.1} parent=1 // pred_check
      _
    $region11: #{tpu_custom_call.1} parent=1 // pred_check_branch
      %27 = sbr.rel (0) target = $region13
    $region12: #{tpu_custom_call.1} parent=1 // pred_region
      _
    $region13: #{tpu_custom_call.1} parent=1 // pred_fallthru
      _
    // Predicated region
    $region14: #{tpu_custom_call.1} parent=1 // pred_check
      _
    $region15: #{tpu_custom_call.1} parent=1 // pred_check_branch
      %29 = sbr.rel (0) target = $region17
    $region16: #{tpu_custom_call.1} parent=1 // pred_region
      _
    $region17: #{tpu_custom_call.1} parent=1 // pred_fallthru
      _
    // Predicated region
    $region18: #{tpu_custom_call.1} parent=1 // pred_check
      _
    $region19: #{tpu_custom_call.1} parent=1 // pred_check_branch
      %31 = sbr.rel (0) target = $region21
    $region20: #{tpu_custom_call.1} parent=1 // pred_region
      _
    $region21: #{tpu_custom_call.1} parent=1 // pred_fallthru
      _
    // Predicated region
    $region22: #{tpu_custom_call.1} parent=1 // pred_check
      _
    $region23: #{tpu_custom_call.1} parent=1 // pred_check_branch
      %33 = sbr.rel (0) target = $region25
    $region24: #{tpu_custom_call.1} parent=1 // pred_region
      %34 = dma.done [#allocation3], 2560
    $region25: #{tpu_custom_call.1} parent=1 // pred_fallthru
      _
    %v35 = vld [vmem:[#allocation2] sm:$0xff]
    %v36 = vld [vmem:[#allocation2 + $0x8] sm:$0xff]
    %v37 = vld [vmem:[#allocation2 + $0x10] sm:$0xff]
    %v38 = vld [vmem:[#allocation2 + $0x18] sm:$0xff]
    %v39 = vld [vmem:[#allocation2 + $0x20] sm:$0xff]
    %v40 = vld [vmem:[#allocation2 + $0x28] sm:$0xff]
    %v41 = vld [vmem:[#allocation2 + $0x30] sm:$0xff]
    %v42 = vld [vmem:[#allocation2 + $0x38] sm:$0xff]
    %v43 = vld [vmem:[#allocation2 + $0x40] sm:$0xff]
    %v44 = vld [vmem:[#allocation2 + $0x48] sm:$0xff]
    %v45 = vld [vmem:[#allocation2 + $0x50] sm:$0xff]
    %v46 = vld [vmem:[#allocation2 + $0x58] sm:$0xff]
    %v47 = vld [vmem:[#allocation2 + $0x60] sm:$0xff]
    %v48 = vld [vmem:[#allocation2 + $0x68] sm:$0xff]
    %v49 = vld [vmem:[#allocation2 + $0x70] sm:$0xff]
    %v50 = vld [vmem:[#allocation2 + $0x78] sm:$0xff]
    %v51 = vld [vmem:[#allocation2 + $0x80] sm:$0xf]
    %v52 = vld [vmem:[#allocation2 + $0x88] sm:$0xf]
    %v53 = vld [vmem:[#allocation2 + $0x90] sm:$0xf]
    %v54 = vld [vmem:[#allocation2 + $0x98] sm:$0xf]
    %v55 = vld [vmem:[%s1] sm:$0xf]
    %v56 = vld [vmem:[%s2] sm:$0xf]
    %58 = vset.pattern.permute.xlu0 0
    %59 = vperm.xlu0 %58, %v56
    %v60 = vpop.permute.xlu0 %59
    %vm62 = vcmask 293888
    %v64 = vsel %vm62, %v55, 0
    %vm66 = vcmask 1043456
    %v68 = vsel %vm66, %v51, 0
    %v71 = vsel %vm66, %v52, 0
    %v74 = vsel %vm66, %v53, 0
    %v77 = vsel %vm66, %v54, 0
    %79 = vmatprep.subr.mxu0 %v36
    %80 = vmatpush1.msra.mxu0 %v35
    %81 = vmatprep.subr.mxu0 %v40
    %82 = vmatpush1.msra.mxu0 %v39
    %83 = vmatprep.subr.mxu0 %v44
    %84 = vmatpush1.msra.mxu0 %v43
    %85 = vmatprep.subr.mxu0 %v48
    %86 = vmatpush1.msra.mxu0 %v47
    %87 = vmatprep.subr.mxu0 %v71
    %88 = vmatpush1.msra.mxu0 %v68
    %89 = vmatprep.subr.mxu0 0.0
    %90 = vmatpush1.msra.mxu0 0.0
    %91 = vmatprep.subr.mxu0 0.0
    %92 = vmatpush1.msra.mxu0 0.0
    %93 = vmatprep.subr.mxu0 0.0
    %94 = vmatpush1.msra.mxu0 0.0
    %95 = vmatprep.subr.mxu0 0.0
    %96 = vmatpush1.msra.mxu0 0.0
    %97 = vmatprep.subr.mxu0 0.0
    %98 = vmatpush1.msra.mxu0 0.0
    %99 = vmatprep.subr.mxu0 0.0
    %100 = vmatpush1.msra.mxu0 0.0
    %101 = vmatprep.subr.mxu0 0.0
    %102 = vmatpush1.msra.mxu0 0.0
    %103 = vmatprep.subr.mxu0 0.0
    %104 = vmatpush1.msra.mxu0 0.0
    %105 = vmatprep.subr.mxu0 0.0
    %106 = vmatpush1.msra.mxu0 0.0
    %107 = vmatprep.subr.mxu0 0.0
    %108 = vmatpush1.msra.mxu0 0.0
    %109 = vmatprep.subr.mxu0 0.0
    %110 = vmatpush1.msra.mxu0 0.0
    %111 = vmatprep.subr.mxu0 0.0
    %112 = vmatpush1.msra.mxu0 0.0
    %113 = vmatprep.subr.mxu0 0.0
    %114 = vmatpush1.msra.mxu0 0.0
    %115 = vmatprep.subr.mxu0 0.0
    %116 = vmatpush1.msra.mxu0 0.0
    %117 = vmatprep.subr.mxu0 0.0
    %118 = vmatpush1.msra.mxu0 0.0
    %119 = vmatprep.subr.mxu0 0.0
    %120 = vmatpush1.msra.mxu0 0.0
    %121 = vmatprep.subr.mxu0 0.0
    %122 = vmatpush1.msra.mxu0 0.0
    %123 = vmatprep.subr.mxu0 0.0
    %124 = vmatpush1.msra.mxu0 0.0
    %125 = vmatprep.subr.mxu0 0.0
    %126 = vmatpush1.msra.mxu0 0.0
    %127 = vmatprep.subr.mxu0 0.0
    %128 = vmatpush1.msra.mxu0 0.0
    %129 = vmatprep.subr.mxu0 0.0
    %130 = vmatpush1.msra.mxu0 0.0
    %131 = vmatprep.subr.mxu0 0.0
    %132 = vmatpush1.msra.mxu0 0.0
    %133 = vmatprep.subr.mxu0 0.0
    %134 = vmatpush1.msra.mxu0 0.0
    %135 = vmatprep.subr.mxu0 0.0
    %136 = vmatpush1.msra.mxu0 0.0
    %137 = vmatprep.subr.mxu0 0.0
    %138 = vmatpush1.msra.mxu0 0.0
    %139 = vmatprep.subr.mxu0 0.0
    %140 = vmatpush1.msra.mxu0 0.0
    %141 = vmatprep.subr.mxu0 0.0
    %142 = vmatpush1.msra.mxu0 0.0
    %143 = vmatprep.mubr.f32.mxu0 0.0
    %144 = vmatmul.mubr.f32.gmra.mrb[0].mxu0 %v64
    %v145 = vpop.f32.mrb[0].mxu0
    %v146 = vadd.f32 %v60, %v145
    %v147 = vpop.f32.mrb[0].mxu0
    %v148 = vadd.f32 %v60, %v147
    %149 = vdwg.mxu0
    %150 = vmatprep.subr.mxu0 %v38
    %151 = vmatpush1.msra.mxu0 %v37
    %152 = vmatprep.subr.mxu0 %v42
    %153 = vmatpush1.msra.mxu0 %v41
    %154 = vmatprep.subr.mxu0 %v46
    %155 = vmatpush1.msra.mxu0 %v45
    %156 = vmatprep.subr.mxu0 %v50
    %157 = vmatpush1.msra.mxu0 %v49
    %158 = vmatprep.subr.mxu0 %v77
    %159 = vmatpush1.msra.mxu0 %v74
    %160 = vmatprep.subr.mxu0 0.0
    %161 = vmatpush1.msra.mxu0 0.0
    %162 = vmatprep.subr.mxu0 0.0
    %163 = vmatpush1.msra.mxu0 0.0
    %164 = vmatprep.subr.mxu0 0.0
    %165 = vmatpush1.msra.mxu0 0.0
    %166 = vmatprep.subr.mxu0 0.0
    %167 = vmatpush1.msra.mxu0 0.0
    %168 = vmatprep.subr.mxu0 0.0
    %169 = vmatpush1.msra.mxu0 0.0
    %170 = vmatprep.subr.mxu0 0.0
    %171 = vmatpush1.msra.mxu0 0.0
    %172 = vmatprep.subr.mxu0 0.0
    %173 = vmatpush1.msra.mxu0 0.0
    %174 = vmatprep.subr.mxu0 0.0
    %175 = vmatpush1.msra.mxu0 0.0
    %176 = vmatprep.subr.mxu0 0.0
    %177 = vmatpush1.msra.mxu0 0.0
    %178 = vmatprep.subr.mxu0 0.0
    %179 = vmatpush1.msra.mxu0 0.0
    %180 = vmatprep.subr.mxu0 0.0
    %181 = vmatpush1.msra.mxu0 0.0
    %182 = vmatprep.subr.mxu0 0.0
    %183 = vmatpush1.msra.mxu0 0.0
    %184 = vmatprep.subr.mxu0 0.0
    %185 = vmatpush1.msra.mxu0 0.0
    %186 = vmatprep.subr.mxu0 0.0
    %187 = vmatpush1.msra.mxu0 0.0
    %188 = vmatprep.subr.mxu0 0.0
    %189 = vmatpush1.msra.mxu0 0.0
    %190 = vmatprep.subr.mxu0 0.0
    %191 = vmatpush1.msra.mxu0 0.0
    %192 = vmatprep.subr.mxu0 0.0
    %193 = vmatpush1.msra.mxu0 0.0
    %194 = vmatprep.subr.mxu0 0.0
    %195 = vmatpush1.msra.mxu0 0.0
    %196 = vmatprep.subr.mxu0 0.0
    %197 = vmatpush1.msra.mxu0 0.0
    %198 = vmatprep.subr.mxu0 0.0
    %199 = vmatpush1.msra.mxu0 0.0
    %200 = vmatprep.subr.mxu0 0.0
    %201 = vmatpush1.msra.mxu0 0.0
    %202 = vmatprep.subr.mxu0 0.0
    %203 = vmatpush1.msra.mxu0 0.0
    %204 = vmatprep.subr.mxu0 0.0
    %205 = vmatpush1.msra.mxu0 0.0
    %206 = vmatprep.subr.mxu0 0.0
    %207 = vmatpush1.msra.mxu0 0.0
    %208 = vmatprep.subr.mxu0 0.0
    %209 = vmatpush1.msra.mxu0 0.0
    %210 = vmatprep.subr.mxu0 0.0
    %211 = vmatpush1.msra.mxu0 0.0
    %212 = vmatprep.subr.mxu0 0.0
    %213 = vmatpush1.msra.mxu0 0.0
    %214 = vmatprep.mubr.f32.mxu0 0.0
    %215 = vmatmul.mubr.f32.gmra.mrb[0].mxu0 %v64
    %v216 = vpop.f32.mrb[0].mxu0
    %v217 = vadd.f32 %v60, %v216
    %v218 = vpop.f32.mrb[0].mxu0
    %v219 = vadd.f32 %v60, %v218
    %220 = vdwg.mxu0
    %v221 = vmax.f32 %v146, 0.0
    %v222 = vmax.f32 %v148, 0.0
    %v223 = vmax.f32 %v217, 0.0
    %v224 = vmax.f32 %v219, 0.0
    %v225 = vld [vmem:[%s3] sm:$0xf]
    %v226 = vld [vmem:[%s4] sm:$0xf]
    %228 = vset.pattern.permute.xlu0 0
    %229 = vperm.xlu0 %228, %v226
    %v230 = vpop.permute.xlu0 %229
    %vm232 = vcmask 31744
    %v234 = vsel %vm232, %v225, 0
    %v237 = vsel %vm66, %v221, 0
    %v240 = vsel %vm66, %v222, 0
    %v243 = vsel %vm66, %v223, 0
    %v246 = vsel %vm66, %v224, 0
    %248 = vmatprep.subr.mxu0 %v240
    %249 = vmatpush1.msra.mxu0 %v237
    %250 = vmatprep.subr.mxu0 0.0
    %251 = vmatpush1.msra.mxu0 0.0
    %252 = vmatprep.subr.mxu0 0.0
    %253 = vmatpush1.msra.mxu0 0.0
    %254 = vmatprep.subr.mxu0 0.0
    %255 = vmatpush1.msra.mxu0 0.0
    %256 = vmatprep.subr.mxu0 0.0
    %257 = vmatpush1.msra.mxu0 0.0
    %258 = vmatprep.subr.mxu0 0.0
    %259 = vmatpush1.msra.mxu0 0.0
    %260 = vmatprep.subr.mxu0 0.0
    %261 = vmatpush1.msra.mxu0 0.0
    %262 = vmatprep.subr.mxu0 0.0
    %263 = vmatpush1.msra.mxu0 0.0
    %264 = vmatprep.subr.mxu0 0.0
    %265 = vmatpush1.msra.mxu0 0.0
    %266 = vmatprep.subr.mxu0 0.0
    %267 = vmatpush1.msra.mxu0 0.0
    %268 = vmatprep.subr.mxu0 0.0
    %269 = vmatpush1.msra.mxu0 0.0
    %270 = vmatprep.subr.mxu0 0.0
    %271 = vmatpush1.msra.mxu0 0.0
    %272 = vmatprep.subr.mxu0 0.0
    %273 = vmatpush1.msra.mxu0 0.0
    %274 = vmatprep.subr.mxu0 0.0
    %275 = vmatpush1.msra.mxu0 0.0
    %276 = vmatprep.subr.mxu0 0.0
    %277 = vmatpush1.msra.mxu0 0.0
    %278 = vmatprep.subr.mxu0 0.0
    %279 = vmatpush1.msra.mxu0 0.0
    %280 = vmatprep.subr.mxu0 0.0
    %281 = vmatpush1.msra.mxu0 0.0
    %282 = vmatprep.subr.mxu0 0.0
    %283 = vmatpush1.msra.mxu0 0.0
    %284 = vmatprep.subr.mxu0 0.0
    %285 = vmatpush1.msra.mxu0 0.0
    %286 = vmatprep.subr.mxu0 0.0
    %287 = vmatpush1.msra.mxu0 0.0
    %288 = vmatprep.subr.mxu0 0.0
    %289 = vmatpush1.msra.mxu0 0.0
    %290 = vmatprep.subr.mxu0 0.0
    %291 = vmatpush1.msra.mxu0 0.0
    %292 = vmatprep.subr.mxu0 0.0
    %293 = vmatpush1.msra.mxu0 0.0
    %294 = vmatprep.subr.mxu0 0.0
    %295 = vmatpush1.msra.mxu0 0.0
    %296 = vmatprep.subr.mxu0 0.0
    %297 = vmatpush1.msra.mxu0 0.0
    %298 = vmatprep.subr.mxu0 0.0
    %299 = vmatpush1.msra.mxu0 0.0
    %300 = vmatprep.subr.mxu0 0.0
    %301 = vmatpush1.msra.mxu0 0.0
    %302 = vmatprep.subr.mxu0 0.0
    %303 = vmatpush1.msra.mxu0 0.0
    %304 = vmatprep.subr.mxu0 0.0
    %305 = vmatpush1.msra.mxu0 0.0
    %306 = vmatprep.subr.mxu0 0.0
    %307 = vmatpush1.msra.mxu0 0.0
    %308 = vmatprep.subr.mxu0 0.0
    %309 = vmatpush1.msra.mxu0 0.0
    %310 = vmatprep.subr.mxu0 0.0
    %311 = vmatpush1.msra.mxu0 0.0
    %312 = vmatprep.mubr.f32.mxu0 0.0
    %313 = vmatmul.mubr.f32.gmra.mrb[0].mxu0 %v234
    %v314 = vpop.f32.mrb[0].mxu0
    %v315 = vadd.f32 %v230, %v314
    %v316 = vpop.f32.mrb[0].mxu0
    %v317 = vadd.f32 %v230, %v316
    %318 = vdwg.mxu0
    %319 = vmatprep.subr.mxu0 %v246
    %320 = vmatpush1.msra.mxu0 %v243
    %321 = vmatprep.subr.mxu0 0.0
    %322 = vmatpush1.msra.mxu0 0.0
    %323 = vmatprep.subr.mxu0 0.0
    %324 = vmatpush1.msra.mxu0 0.0
    %325 = vmatprep.subr.mxu0 0.0
    %326 = vmatpush1.msra.mxu0 0.0
    %327 = vmatprep.subr.mxu0 0.0
    %328 = vmatpush1.msra.mxu0 0.0
    %329 = vmatprep.subr.mxu0 0.0
    %330 = vmatpush1.msra.mxu0 0.0
    %331 = vmatprep.subr.mxu0 0.0
    %332 = vmatpush1.msra.mxu0 0.0
    %333 = vmatprep.subr.mxu0 0.0
    %334 = vmatpush1.msra.mxu0 0.0
    %335 = vmatprep.subr.mxu0 0.0
    %336 = vmatpush1.msra.mxu0 0.0
    %337 = vmatprep.subr.mxu0 0.0
    %338 = vmatpush1.msra.mxu0 0.0
    %339 = vmatprep.subr.mxu0 0.0
    %340 = vmatpush1.msra.mxu0 0.0
    %341 = vmatprep.subr.mxu0 0.0
    %342 = vmatpush1.msra.mxu0 0.0
    %343 = vmatprep.subr.mxu0 0.0
    %344 = vmatpush1.msra.mxu0 0.0
    %345 = vmatprep.subr.mxu0 0.0
    %346 = vmatpush1.msra.mxu0 0.0
    %347 = vmatprep.subr.mxu0 0.0
    %348 = vmatpush1.msra.mxu0 0.0
    %349 = vmatprep.subr.mxu0 0.0
    %350 = vmatpush1.msra.mxu0 0.0
    %351 = vmatprep.subr.mxu0 0.0
    %352 = vmatpush1.msra.mxu0 0.0
    %353 = vmatprep.subr.mxu0 0.0
    %354 = vmatpush1.msra.mxu0 0.0
    %355 = vmatprep.subr.mxu0 0.0
    %356 = vmatpush1.msra.mxu0 0.0
    %357 = vmatprep.subr.mxu0 0.0
    %358 = vmatpush1.msra.mxu0 0.0
    %359 = vmatprep.subr.mxu0 0.0
    %360 = vmatpush1.msra.mxu0 0.0
    %361 = vmatprep.subr.mxu0 0.0
    %362 = vmatpush1.msra.mxu0 0.0
    %363 = vmatprep.subr.mxu0 0.0
    %364 = vmatpush1.msra.mxu0 0.0
    %365 = vmatprep.subr.mxu0 0.0
    %366 = vmatpush1.msra.mxu0 0.0
    %367 = vmatprep.subr.mxu0 0.0
    %368 = vmatpush1.msra.mxu0 0.0
    %369 = vmatprep.subr.mxu0 0.0
    %370 = vmatpush1.msra.mxu0 0.0
    %371 = vmatprep.subr.mxu0 0.0
    %372 = vmatpush1.msra.mxu0 0.0
    %373 = vmatprep.subr.mxu0 0.0
    %374 = vmatpush1.msra.mxu0 0.0
    %375 = vmatprep.subr.mxu0 0.0
    %376 = vmatpush1.msra.mxu0 0.0
    %377 = vmatprep.subr.mxu0 0.0
    %378 = vmatpush1.msra.mxu0 0.0
    %379 = vmatprep.subr.mxu0 0.0
    %380 = vmatpush1.msra.mxu0 0.0
    %381 = vmatprep.subr.mxu0 0.0
    %382 = vmatpush1.msra.mxu0 0.0
    %383 = vmatprep.mubr.f32.mxu0 0.0
    %384 = vmatmul.mubr.f32.gmra.mrb[0].mxu0 %v234
    %v385 = vpop.f32.mrb[0].mxu0
    %v386 = vadd.f32 %v230, %v385
    %v387 = vpop.f32.mrb[0].mxu0
    %v388 = vadd.f32 %v230, %v387
    %389 = vdwg.mxu0
    %v390 = vadd.f32 %v43, %v315
    %v391 = vadd.f32 %v44, %v317
    %v392 = vadd.f32 %v45, %v386
    %v393 = vadd.f32 %v46, %v388
    %v396 = vcombine.low %v390, %v391
    %398 = vst [vmem:[#allocation5] sm:$0xff] %v396
    %v401 = vcombine.low %v392, %v393
    %s403 = scalar_lea.vmem [#allocation5], 8
    %404 = vst [vmem:[%s403] sm:$0xff] %v401
    // Predicated region
    $region26: #{tpu_custom_call.1} parent=1 // pred_check
      _
    $region27: #{tpu_custom_call.1} parent=1 // pred_check_branch
      %406 = sbr.rel (0) target = $region29
    $region28: #{tpu_custom_call.1} parent=1 // pred_region
      %s408 = ssub.s32 256, 256
      %409 = vsyncadd [#allocation4], %s408
      %s410 = sshll.u32 [#allocation5], 4
      %s411 = int_to_ptr.vmem [resolvable:$true] %s410
      %416 = dma.vmem_to_hbm [thread:$0]  %s411, 256, %s5, [#allocation4], 128, 128, 8
    $region29: #{tpu_custom_call.1} parent=1 // pred_fallthru
      _
    // Predicated region
    $region30: #{tpu_custom_call.1} parent=1 // pred_check
      _
    $region31: #{tpu_custom_call.1} parent=1 // pred_check_branch
      %418 = sbr.rel (0) target = $region33
    $region32: #{tpu_custom_call.1} parent=1 // pred_region
      %419 = dma.done [#allocation4], 256
    $region33: #{tpu_custom_call.1} parent=1 // pred_fallthru
      _
    %420 = vsyncpa [#allocation3], 1
    %421 = vsyncpa [#allocation4], 1

</llo_original>
